<compile_context>
chip_gen: v7x
topology: tpu7x:2x2x1
jax: 0.10.0
libtpu: 0.0.40
codegen_flags: <defaults>
</compile_context>

<pallas_src>
import math
import numpy as np
import jax
import jax.numpy as jnp
from jax.experimental import pallas as pl
from jax.experimental.pallas import tpu as pltpu

N_CLASS = 3
K = 5        # conv kernel size
C_IN = 3
C_OUT = 5
POOL = 5     # adaptive pool output size

_HI = jax.lax.Precision.HIGHEST


def fused_affine_kernel(x_ref, w_ref, b_ref, o_ref):
    # x_ref: (N, D)  w_ref: (D, N_CLASS)  b_ref: (1, N_CLASS)  o_ref: (N, N_CLASS)
    o_ref[...] = (
        jnp.dot(x_ref[...], w_ref[...], preferred_element_type=jnp.float32)
        + b_ref[...]
    )


def adaptive_pool_matrix(in_h, in_w, out_size):
    # Exact PyTorch AdaptiveAvgPool2d window semantics, as an averaging matrix.
    def axis_mat(n_in, n_out):
        m = np.zeros((n_in, n_out), dtype=np.float32)
        for i in range(n_out):
            s = (i * n_in) // n_out
            e = math.ceil((i + 1) * n_in / n_out)
            m[s:e, i] = 1.0 / (e - s)
        return m
    # P[h*in_w + w, i*out + j] = ph[h, i] * pw[w, j]
    return np.kron(axis_mat(in_h, out_size), axis_mat(in_w, out_size))


@jax.jit
def amodel_forward(x, params):
    wconv, bconv, wlin, blin = params
    N, C, H, W = x.shape
    Ho, Wo = H - K + 1, W - K + 1
    S = Ho * Wo
    D = C * H * W

    # ---------- fold pool ∘ linear (pmat depends only on static shapes) ----------
    pmat = jnp.asarray(adaptive_pool_matrix(Ho, Wo, POOL))        # (S, 25), constant
    wlin_r = wlin.reshape(N_CLASS, C_OUT, POOL * POOL)            # torch flatten order
    # w_cl[o, c, s] maps conv output (c, s) directly to logit o.
    w_cl = jnp.einsum('ocp,sp->ocs', wlin_r, pmat, precision=_HI)  # (3, C_OUT, S)

    # ---------- fold the conv weights (and im2col) into w_cl ----------
    w_cs = w_cl.reshape(N_CLASS, C_OUT, Ho, Wo)
    # t[o, i, kh, kw, h', w'] = sum_c wconv[c, i, kh, kw] * w_cs[o, c, h', w']
    t = jnp.einsum('cikl,ochw->oiklhw', wconv, w_cs, precision=_HI)
    w_x = jnp.zeros((N_CLASS, C, H, W), jnp.float32)
    for kh in range(K):                        # 25 static tap scatter-adds (weights only)
        for kw in range(K):
            w_x = w_x.at[:, :, kh:kh + Ho, kw:kw + Wo].add(t[:, :, kh, kw])
    # Match x.reshape(N, C*H*W) flattening order (c, h, w).
    w_eff = w_x.transpose(1, 2, 3, 0).reshape(D, N_CLASS)         # (768, 3)

    # ---------- fold biases ----------
    b_eff = (blin + jnp.einsum('ocs,c->o', w_cl, bconv, precision=_HI)
             ).reshape(1, N_CLASS)

    x_flat = x.reshape(N, D)                                      # (N, 768), lane-dense K dim

    # Single Pallas kernel, single grid step for the whole batch.
    # (For very large N one would block the batch rows instead of (N, D).)
    return pl.pallas_call(
        fused_affine_kernel,
        out_shape=jax.ShapeDtypeStruct((N, N_CLASS), jnp.float32),
        grid=(1,),
        in_specs=[
            pl.BlockSpec((N, D), lambda i: (0, 0)),
            pl.BlockSpec((D, N_CLASS), lambda i: (0, 0)),
            pl.BlockSpec((1, N_CLASS), lambda i: (0, 0)),
        ],
        out_specs=pl.BlockSpec((N, N_CLASS), lambda i: (0, 0)),
        compiler_params=pltpu.CompilerParams(
            dimension_semantics=("arbitrary",)),
    )(x_flat, w_eff, b_eff)


def reference_forward(x, params):
    # Pure-JAX reference (conv -> adaptive avg pool -> flatten -> linear).
    wconv, bconv, wlin, blin = params
    conv = jax.lax.conv_general_dilated(
        x, wconv, window_strides=(1, 1), padding="VALID",
        dimension_numbers=("NCHW", "OIHW", "NCHW"), precision=_HI)
    conv = conv + bconv[None, :, None, None]
    N, C, Ho, Wo = conv.shape
    rows = []
    for i in range(POOL):
        hs, he = (i * Ho) // POOL, math.ceil((i + 1) * Ho / POOL)
        cols = []
        for j in range(POOL):
            ws, we = (j * Wo) // POOL, math.ceil((j + 1) * Wo / POOL)
            cols.append(conv[:, :, hs:he, ws:we].mean(axis=(2, 3)))
        rows.append(jnp.stack(cols, axis=-1))
    pooled = jnp.stack(rows, axis=-2)            # (N, C, POOL, POOL)
    feats = pooled.reshape(N, -1)
    return jnp.dot(feats, wlin.T, precision=_HI) + blin


if __name__ == "__main__":
    key = jax.random.PRNGKey(0)
    kx, kw1, kb1, kw2, kb2 = jax.random.split(key, 5)
    x = jax.random.normal(kx, (2, 3, 16, 16), dtype=jnp.float32)
    # Deterministic synthetic parameters (shapes from the module's __init__).
    wconv = jax.random.normal(kw1, (C_OUT, C_IN, K, K), dtype=jnp.float32) * 0.1
    bconv = jax.random.normal(kb1, (C_OUT,), dtype=jnp.float32) * 0.1
    wlin = jax.random.normal(kw2, (N_CLASS, C_OUT * POOL * POOL), dtype=jnp.float32) * 0.1
    blin = jax.random.normal(kb2, (N_CLASS,), dtype=jnp.float32) * 0.1
    params = (wconv, bconv, wlin, blin)

    out = jax.block_until_ready(amodel_forward(x, params))
    ref = jax.block_until_ready(reference_forward(x, params))
    assert out.shape == (2, N_CLASS)
    np.testing.assert_allclose(np.asarray(out), np.asarray(ref), rtol=1e-3, atol=1e-3)
    print("KERNEL_OK")
</pallas_src>

<mosaic_0001>
module attributes {stable_mosaic.version = 11 : i64} {
  func.func @fused_affine_kernel(%arg0: i32, %arg1: memref<2x768xf32, #tpu.memory_space<vmem>>, %arg2: memref<768x3xf32, #tpu.memory_space<vmem>>, %arg3: memref<1x3xf32, #tpu.memory_space<vmem>>, %arg4: memref<2x3xf32, #tpu.memory_space<vmem>>) attributes {dimension_semantics = [#tpu.dimension_semantics<arbitrary>], iteration_bounds = array<i64: 1>, scalar_prefetch = 0 : i64, scratch_operands = 0 : i64, tpu.core_type = #tpu.core_type<tc>, window_params = [{pipeline_mode = #tpu.pipeline_mode<synchronous>, transform_indices = @transform_0, window_bounds = array<i64: 2, 768>}, {pipeline_mode = #tpu.pipeline_mode<synchronous>, transform_indices = @transform_1, window_bounds = array<i64: 768, 3>}, {pipeline_mode = #tpu.pipeline_mode<synchronous>, transform_indices = @transform_2, window_bounds = array<i64: 1, 3>}, {pipeline_mode = #tpu.pipeline_mode<synchronous>, transform_indices = @transform_3, window_bounds = array<i64: 2, 3>}]} {
    %c0 = arith.constant 0 : index
    %c0_0 = arith.constant 0 : index
    %0 = vector.load %arg1[%c0, %c0_0] : memref<2x768xf32, #tpu.memory_space<vmem>>, vector<2x768xf32>
    %c0_1 = arith.constant 0 : index
    %c0_2 = arith.constant 0 : index
    %1 = vector.load %arg2[%c0_1, %c0_2] : memref<768x3xf32, #tpu.memory_space<vmem>>, vector<768x3xf32>
    %cst = arith.constant dense<0.000000e+00> : vector<2x3xf32>
    %2 = tpu.matmul %0, %1, %cst {dimension_numbers = #tpu.dot_dimension_numbers<[1], [0], [0], [1], [0, 0, 1, 1], [], []>} : vector<2x768xf32>, vector<768x3xf32>, vector<2x3xf32> -> vector<2x3xf32>
    %c0_3 = arith.constant 0 : index
    %c0_4 = arith.constant 0 : index
    %3 = vector.load %arg3[%c0_3, %c0_4] : memref<1x3xf32, #tpu.memory_space<vmem>>, vector<1x3xf32>
    %4 = vector.broadcast %3 : vector<1x3xf32> to vector<2x3xf32>
    %5 = arith.addf %2, %4 : vector<2x3xf32>
    %c0_5 = arith.constant 0 : index
    %c0_6 = arith.constant 0 : index
    %6 = vector.load %arg4[%c0_5, %c0_6] : memref<2x3xf32, #tpu.memory_space<vmem>>, vector<2x3xf32>
    tpu.vector_store %arg4[%c0_5, %c0_6], %5 {strides = array<i32>} : memref<2x3xf32, #tpu.memory_space<vmem>>, vector<2x3xf32>,
    return
  }
  func.func @transform_0(%arg0: i32) -> (i32, i32) {
    %c0_i32 = arith.constant 0 : i32
    %c0_i32_0 = arith.constant 0 : i32
    %c0_i32_1 = arith.constant 0 : i32
    return %c0_i32, %c0_i32_0 : i32, i32
  }
  func.func @transform_1(%arg0: i32) -> (i32, i32) {
    %c0_i32 = arith.constant 0 : i32
    %c0_i32_0 = arith.constant 0 : i32
    %c0_i32_1 = arith.constant 0 : i32
    return %c0_i32, %c0_i32_0 : i32, i32
  }
  func.func @transform_2(%arg0: i32) -> (i32, i32) {
    %c0_i32 = arith.constant 0 : i32
    %c0_i32_0 = arith.constant 0 : i32
    %c0_i32_1 = arith.constant 0 : i32
    return %c0_i32, %c0_i32_0 : i32, i32
  }
  func.func @transform_3(%arg0: i32) -> (i32, i32) {
    %c0_i32 = arith.constant 0 : i32
    %c0_i32_0 = arith.constant 0 : i32
    %c0_i32_1 = arith.constant 0 : i32
    return %c0_i32, %c0_i32_0 : i32, i32
  }
}

</mosaic_0001>

<llo_original>
// kernel: amodel_forward.1
$region0: #{amodel_forward.1}
  #allocation0 [shape = 'u32[]', space=smem, size = 0x4, offset = 0x4, fixed_abs, tag = 'smem constant byte address 0x4 - core index']
  #allocation1 [shape = 'u32[144,128]{1,0:T(1,128)}', space=vmem, size = 0x12000, scoped, tag = 'internal scratch']
  %s0 = inlined_call_operand.vmem [shape: f32[2,768], index: 0, kind: input, shape index: {}]
  %s1 = inlined_call_operand.vmem [shape: f32[768,3], index: 1, kind: input, shape index: {}]
  %s2 = inlined_call_operand.vmem [shape: f32[1,3], index: 2, kind: input, shape index: {}]
  %s3 = inlined_call_operand.hbm [shape: f32[2,3], index: 3, kind: output, shape index: {}]
  %s4 = sld [smem:[#allocation0]]
  $region22: #{amodel_forward.1} parent=0
    _
  %s6 = ssub.s32 1, %s4
  %s7 = scalar_select 0, %s6, %s4
  $region1: #{amodel_forward.1} parent=0
    #allocation2 [shape = 'u8[1024]{0}', space=vmem, size = 0x400, scoped, tag = 'output window, operand 0, single buffered']
    #allocation3 [shape = 's32[1]{0}', space=sflag, size = 0x4, scoped, tag = 'scoped memory for amodel_forward.1']
    %8 = vsyncpa [#allocation3], 0
    // Predicated region
    $region2: #{amodel_forward.1} parent=1 // pred_check
      _
    $region3: #{amodel_forward.1} parent=1 // pred_check_branch
      %10 = sbr.rel (0) target = $region5
    $region4: #{amodel_forward.1} parent=1 // pred_region
      _
    $region5: #{amodel_forward.1} parent=1 // pred_fallthru
      _
    // Predicated region
    $region6: #{amodel_forward.1} parent=1 // pred_check
      _
    $region7: #{amodel_forward.1} parent=1 // pred_check_branch
      %12 = sbr.rel (0) target = $region9
    $region8: #{amodel_forward.1} parent=1 // pred_region
      _
    $region9: #{amodel_forward.1} parent=1 // pred_fallthru
      _
    // Predicated region
    $region10: #{amodel_forward.1} parent=1 // pred_check
      _
    $region11: #{amodel_forward.1} parent=1 // pred_check_branch
      %14 = sbr.rel (0) target = $region13
    $region12: #{amodel_forward.1} parent=1 // pred_region
      _
    $region13: #{amodel_forward.1} parent=1 // pred_fallthru
      _
    %v15 = vld [vmem:[%s0] sm:$0xff]
    %v16 = vld [vmem:[%s0 + $0x8] sm:$0xf]
    %v17 = vld [vmem:[%s1] sm:$0xff]
    %v18 = vld [vmem:[%s1 + $0x8] sm:$0xff]
    %v19 = vld [vmem:[%s1 + $0x10] sm:$0xff]
    %v20 = vld [vmem:[%s1 + $0x18] sm:$0xff]
    %v21 = vld [vmem:[%s1 + $0x20] sm:$0xff]
    %v22 = vld [vmem:[%s1 + $0x28] sm:$0xff]
    %v23 = vld [vmem:[%s1 + $0x30] sm:$0xff]
    %v24 = vld [vmem:[%s1 + $0x38] sm:$0xff]
    %v25 = vld [vmem:[%s1 + $0x40] sm:$0xff]
    %v26 = vld [vmem:[%s1 + $0x48] sm:$0xff]
    %v27 = vld [vmem:[%s1 + $0x50] sm:$0xff]
    %v28 = vld [vmem:[%s1 + $0x58] sm:$0xff]
    %v29 = vld [vmem:[%s1 + $0x60] sm:$0xff]
    %v30 = vld [vmem:[%s1 + $0x68] sm:$0xff]
    %v31 = vld [vmem:[%s1 + $0x70] sm:$0xff]
    %v32 = vld [vmem:[%s1 + $0x78] sm:$0xff]
    %v33 = vld [vmem:[%s1 + $0x80] sm:$0xff]
    %v34 = vld [vmem:[%s1 + $0x88] sm:$0xff]
    %v35 = vld [vmem:[%s1 + $0x90] sm:$0xff]
    %v36 = vld [vmem:[%s1 + $0x98] sm:$0xff]
    %v37 = vld [vmem:[%s1 + $0xa0] sm:$0xff]
    %v38 = vld [vmem:[%s1 + $0xa8] sm:$0xff]
    %v39 = vld [vmem:[%s1 + $0xb0] sm:$0xff]
    %v40 = vld [vmem:[%s1 + $0xb8] sm:$0xff]
    %v41 = vld [vmem:[%s1 + $0xc0] sm:$0xff]
    %v42 = vld [vmem:[%s1 + $0xc8] sm:$0xff]
    %v43 = vld [vmem:[%s1 + $0xd0] sm:$0xff]
    %v44 = vld [vmem:[%s1 + $0xd8] sm:$0xff]
    %v45 = vld [vmem:[%s1 + $0xe0] sm:$0xff]
    %v46 = vld [vmem:[%s1 + $0xe8] sm:$0xff]
    %v47 = vld [vmem:[%s1 + $0xf0] sm:$0xff]
    %v48 = vld [vmem:[%s1 + $0xf8] sm:$0xff]
    %v49 = vld [vmem:[%s1 + $0x100] sm:$0xff]
    %v50 = vld [vmem:[%s1 + $0x108] sm:$0xff]
    %v51 = vld [vmem:[%s1 + $0x110] sm:$0xff]
    %v52 = vld [vmem:[%s1 + $0x118] sm:$0xff]
    %v53 = vld [vmem:[%s1 + $0x120] sm:$0xff]
    %v54 = vld [vmem:[%s1 + $0x128] sm:$0xff]
    %v55 = vld [vmem:[%s1 + $0x130] sm:$0xff]
    %v56 = vld [vmem:[%s1 + $0x138] sm:$0xff]
    %v57 = vld [vmem:[%s1 + $0x140] sm:$0xff]
    %v58 = vld [vmem:[%s1 + $0x148] sm:$0xff]
    %v59 = vld [vmem:[%s1 + $0x150] sm:$0xff]
    %v60 = vld [vmem:[%s1 + $0x158] sm:$0xff]
    %v61 = vld [vmem:[%s1 + $0x160] sm:$0xff]
    %v62 = vld [vmem:[%s1 + $0x168] sm:$0xff]
    %v63 = vld [vmem:[%s1 + $0x170] sm:$0xff]
    %v64 = vld [vmem:[%s1 + $0x178] sm:$0xff]
    %v65 = vld [vmem:[%s1 + $0x180] sm:$0xff]
    %v66 = vld [vmem:[%s1 + $0x188] sm:$0xff]
    %v67 = vld [vmem:[%s1 + $0x190] sm:$0xff]
    %v68 = vld [vmem:[%s1 + $0x198] sm:$0xff]
    %v69 = vld [vmem:[%s1 + $0x1a0] sm:$0xff]
    %v70 = vld [vmem:[%s1 + $0x1a8] sm:$0xff]
    %v71 = vld [vmem:[%s1 + $0x1b0] sm:$0xff]
    %v72 = vld [vmem:[%s1 + $0x1b8] sm:$0xff]
    %v73 = vld [vmem:[%s1 + $0x1c0] sm:$0xff]
    %v74 = vld [vmem:[%s1 + $0x1c8] sm:$0xff]
    %v75 = vld [vmem:[%s1 + $0x1d0] sm:$0xff]
    %v76 = vld [vmem:[%s1 + $0x1d8] sm:$0xff]
    %v77 = vld [vmem:[%s1 + $0x1e0] sm:$0xff]
    %v78 = vld [vmem:[%s1 + $0x1e8] sm:$0xff]
    %v79 = vld [vmem:[%s1 + $0x1f0] sm:$0xff]
    %v80 = vld [vmem:[%s1 + $0x1f8] sm:$0xff]
    %v81 = vld [vmem:[%s1 + $0x200] sm:$0xff]
    %v82 = vld [vmem:[%s1 + $0x208] sm:$0xff]
    %v83 = vld [vmem:[%s1 + $0x210] sm:$0xff]
    %v84 = vld [vmem:[%s1 + $0x218] sm:$0xff]
    %v85 = vld [vmem:[%s1 + $0x220] sm:$0xff]
    %v86 = vld [vmem:[%s1 + $0x228] sm:$0xff]
    %v87 = vld [vmem:[%s1 + $0x230] sm:$0xff]
    %v88 = vld [vmem:[%s1 + $0x238] sm:$0xff]
    %v89 = vld [vmem:[%s1 + $0x240] sm:$0xff]
    %v90 = vld [vmem:[%s1 + $0x248] sm:$0xff]
    %v91 = vld [vmem:[%s1 + $0x250] sm:$0xff]
    %v92 = vld [vmem:[%s1 + $0x258] sm:$0xff]
    %v93 = vld [vmem:[%s1 + $0x260] sm:$0xff]
    %v94 = vld [vmem:[%s1 + $0x268] sm:$0xff]
    %v95 = vld [vmem:[%s1 + $0x270] sm:$0xff]
    %v96 = vld [vmem:[%s1 + $0x278] sm:$0xff]
    %v97 = vld [vmem:[%s1 + $0x280] sm:$0xff]
    %v98 = vld [vmem:[%s1 + $0x288] sm:$0xff]
    %v99 = vld [vmem:[%s1 + $0x290] sm:$0xff]
    %v100 = vld [vmem:[%s1 + $0x298] sm:$0xff]
    %v101 = vld [vmem:[%s1 + $0x2a0] sm:$0xff]
    %v102 = vld [vmem:[%s1 + $0x2a8] sm:$0xff]
    %v103 = vld [vmem:[%s1 + $0x2b0] sm:$0xff]
    %v104 = vld [vmem:[%s1 + $0x2b8] sm:$0xff]
    %v105 = vld [vmem:[%s1 + $0x2c0] sm:$0xff]
    %v106 = vld [vmem:[%s1 + $0x2c8] sm:$0xff]
    %v107 = vld [vmem:[%s1 + $0x2d0] sm:$0xff]
    %v108 = vld [vmem:[%s1 + $0x2d8] sm:$0xff]
    %v109 = vld [vmem:[%s1 + $0x2e0] sm:$0xff]
    %v110 = vld [vmem:[%s1 + $0x2e8] sm:$0xff]
    %v111 = vld [vmem:[%s1 + $0x2f0] sm:$0xff]
    %v112 = vld [vmem:[%s1 + $0x2f8] sm:$0xff]
    %v113 = vld [vmem:[%s2] sm:$0x1]
    %v115 = vlaneseq
    %v116 = vshrl.u32 %v115, 7
    %v117 = vsub.s32 0, %v116
    %v118 = vrot.slane %v113, %v117
    %v122 = vcombine.high %v15, %v15
    %v124 = vunpack.c.l.s4 1983009808
    %v125 = vunpack.c.0.s8 %v124
    %v126 = vlaneseq
    %v127 = vshrl.u32 %v126, 7
    %v128 = vsub.s32 %v125, %v127
    %v129 = vrot.slane %v15, %v128
    %v131 = vunpack.c.l.s4 1983009808
    %v132 = vunpack.c.0.s8 %v131
    %v133 = vlaneseq
    %v134 = vshrl.u32 %v133, 7
    %v135 = vsub.s32 %v132, %v134
    %v136 = vrot.slane %v122, %v135
    %v137 = vcombine.high %v129, %v129
    %v138 = vcombine.high %v136, %v136
    %v140 = vunpack.c.l.s4 1983009808
    %v141 = vunpack.c.0.s8 %v140
    %v142 = vlaneseq
    %v143 = vshrl.u32 %v142, 7
    %v144 = vsub.s32 %v141, %v143
    %v145 = vrot.slane %v16, %v144
    %v146 = vcombine.high %v145, %v145
    %153 = vmatprep.subr.mxu0 0.0
    %154 = vmatpush1.msra.mxu0 %v17
    %155 = vmatprep.subr.mxu0 0.0
    %156 = vmatpush1.msra.mxu0 %v18
    %157 = vmatprep.subr.mxu0 0.0
    %158 = vmatpush1.msra.mxu0 %v19
    %159 = vmatprep.subr.mxu0 0.0
    %160 = vmatpush1.msra.mxu0 %v20
    %161 = vmatprep.subr.mxu0 0.0
    %162 = vmatpush1.msra.mxu0 %v21
    %163 = vmatprep.subr.mxu0 0.0
    %164 = vmatpush1.msra.mxu0 %v22
    %165 = vmatprep.subr.mxu0 0.0
    %166 = vmatpush1.msra.mxu0 %v23
    %167 = vmatprep.subr.mxu0 0.0
    %168 = vmatpush1.msra.mxu0 %v24
    %169 = vmatprep.subr.mxu0 0.0
    %170 = vmatpush1.msra.mxu0 %v25
    %171 = vmatprep.subr.mxu0 0.0
    %172 = vmatpush1.msra.mxu0 %v26
    %173 = vmatprep.subr.mxu0 0.0
    %174 = vmatpush1.msra.mxu0 %v27
    %175 = vmatprep.subr.mxu0 0.0
    %176 = vmatpush1.msra.mxu0 %v28
    %177 = vmatprep.subr.mxu0 0.0
    %178 = vmatpush1.msra.mxu0 %v29
    %179 = vmatprep.subr.mxu0 0.0
    %180 = vmatpush1.msra.mxu0 %v30
    %181 = vmatprep.subr.mxu0 0.0
    %182 = vmatpush1.msra.mxu0 %v31
    %183 = vmatprep.subr.mxu0 0.0
    %184 = vmatpush1.msra.mxu0 %v32
    %185 = vmatprep.subr.mxu0 0.0
    %186 = vmatpush1.msra.mxu0 %v33
    %187 = vmatprep.subr.mxu0 0.0
    %188 = vmatpush1.msra.mxu0 %v34
    %189 = vmatprep.subr.mxu0 0.0
    %190 = vmatpush1.msra.mxu0 %v35
    %191 = vmatprep.subr.mxu0 0.0
    %192 = vmatpush1.msra.mxu0 %v36
    %193 = vmatprep.subr.mxu0 0.0
    %194 = vmatpush1.msra.mxu0 %v37
    %195 = vmatprep.subr.mxu0 0.0
    %196 = vmatpush1.msra.mxu0 %v38
    %197 = vmatprep.subr.mxu0 0.0
    %198 = vmatpush1.msra.mxu0 %v39
    %199 = vmatprep.subr.mxu0 0.0
    %200 = vmatpush1.msra.mxu0 %v40
    %201 = vmatprep.subr.mxu0 0.0
    %202 = vmatpush1.msra.mxu0 %v41
    %203 = vmatprep.subr.mxu0 0.0
    %204 = vmatpush1.msra.mxu0 %v42
    %205 = vmatprep.subr.mxu0 0.0
    %206 = vmatpush1.msra.mxu0 %v43
    %207 = vmatprep.subr.mxu0 0.0
    %208 = vmatpush1.msra.mxu0 %v44
    %209 = vmatprep.subr.mxu0 0.0
    %210 = vmatpush1.msra.mxu0 %v45
    %211 = vmatprep.subr.mxu0 0.0
    %212 = vmatpush1.msra.mxu0 %v46
    %213 = vmatprep.subr.mxu0 0.0
    %214 = vmatpush1.msra.mxu0 %v47
    %215 = vmatprep.subr.mxu0 0.0
    %216 = vmatpush1.msra.mxu0 %v48
    %217 = vmatprep.mubr.f32.mxu0 %v137
    %218 = vmatmul.mubr.f32.gmra.mrb[0].mxu0 %v129
    %v219 = vpop.f32.mrb[0].mxu0
    %v220 = vadd.f32 %v118, %v219
    %v221 = vpop.f32.mrb[0].mxu0
    %222 = vdwg.mxu0
    %223 = vmatprep.subr.mxu0 0.0
    %224 = vmatpush1.msra.mxu0 %v49
    %225 = vmatprep.subr.mxu0 0.0
    %226 = vmatpush1.msra.mxu0 %v50
    %227 = vmatprep.subr.mxu0 0.0
    %228 = vmatpush1.msra.mxu0 %v51
    %229 = vmatprep.subr.mxu0 0.0
    %230 = vmatpush1.msra.mxu0 %v52
    %231 = vmatprep.subr.mxu0 0.0
    %232 = vmatpush1.msra.mxu0 %v53
    %233 = vmatprep.subr.mxu0 0.0
    %234 = vmatpush1.msra.mxu0 %v54
    %235 = vmatprep.subr.mxu0 0.0
    %236 = vmatpush1.msra.mxu0 %v55
    %237 = vmatprep.subr.mxu0 0.0
    %238 = vmatpush1.msra.mxu0 %v56
    %239 = vmatprep.subr.mxu0 0.0
    %240 = vmatpush1.msra.mxu0 %v57
    %241 = vmatprep.subr.mxu0 0.0
    %242 = vmatpush1.msra.mxu0 %v58
    %243 = vmatprep.subr.mxu0 0.0
    %244 = vmatpush1.msra.mxu0 %v59
    %245 = vmatprep.subr.mxu0 0.0
    %246 = vmatpush1.msra.mxu0 %v60
    %247 = vmatprep.subr.mxu0 0.0
    %248 = vmatpush1.msra.mxu0 %v61
    %249 = vmatprep.subr.mxu0 0.0
    %250 = vmatpush1.msra.mxu0 %v62
    %251 = vmatprep.subr.mxu0 0.0
    %252 = vmatpush1.msra.mxu0 %v63
    %253 = vmatprep.subr.mxu0 0.0
    %254 = vmatpush1.msra.mxu0 %v64
    %255 = vmatprep.subr.mxu0 0.0
    %256 = vmatpush1.msra.mxu0 %v65
    %257 = vmatprep.subr.mxu0 0.0
    %258 = vmatpush1.msra.mxu0 %v66
    %259 = vmatprep.subr.mxu0 0.0
    %260 = vmatpush1.msra.mxu0 %v67
    %261 = vmatprep.subr.mxu0 0.0
    %262 = vmatpush1.msra.mxu0 %v68
    %263 = vmatprep.subr.mxu0 0.0
    %264 = vmatpush1.msra.mxu0 %v69
    %265 = vmatprep.subr.mxu0 0.0
    %266 = vmatpush1.msra.mxu0 %v70
    %267 = vmatprep.subr.mxu0 0.0
    %268 = vmatpush1.msra.mxu0 %v71
    %269 = vmatprep.subr.mxu0 0.0
    %270 = vmatpush1.msra.mxu0 %v72
    %271 = vmatprep.subr.mxu0 0.0
    %272 = vmatpush1.msra.mxu0 %v73
    %273 = vmatprep.subr.mxu0 0.0
    %274 = vmatpush1.msra.mxu0 %v74
    %275 = vmatprep.subr.mxu0 0.0
    %276 = vmatpush1.msra.mxu0 %v75
    %277 = vmatprep.subr.mxu0 0.0
    %278 = vmatpush1.msra.mxu0 %v76
    %279 = vmatprep.subr.mxu0 0.0
    %280 = vmatpush1.msra.mxu0 %v77
    %281 = vmatprep.subr.mxu0 0.0
    %282 = vmatpush1.msra.mxu0 %v78
    %283 = vmatprep.subr.mxu0 0.0
    %284 = vmatpush1.msra.mxu0 %v79
    %285 = vmatprep.subr.mxu0 0.0
    %286 = vmatpush1.msra.mxu0 %v80
    %287 = vmatprep.mubr.f32.mxu0 %v138
    %288 = vmatmul.mubr.f32.gmra.mrb[0].mxu0 %v136
    %v289 = vpop.f32.mrb[0].mxu0
    %v290 = vadd.f32 %v220, %v289
    %v291 = vpop.f32.mrb[0].mxu0
    %292 = vdwg.mxu0
    %293 = vmatprep.subr.mxu0 0.0
    %294 = vmatpush1.msra.mxu0 %v81
    %295 = vmatprep.subr.mxu0 0.0
    %296 = vmatpush1.msra.mxu0 %v82
    %297 = vmatprep.subr.mxu0 0.0
    %298 = vmatpush1.msra.mxu0 %v83
    %299 = vmatprep.subr.mxu0 0.0
    %300 = vmatpush1.msra.mxu0 %v84
    %301 = vmatprep.subr.mxu0 0.0
    %302 = vmatpush1.msra.mxu0 %v85
    %303 = vmatprep.subr.mxu0 0.0
    %304 = vmatpush1.msra.mxu0 %v86
    %305 = vmatprep.subr.mxu0 0.0
    %306 = vmatpush1.msra.mxu0 %v87
    %307 = vmatprep.subr.mxu0 0.0
    %308 = vmatpush1.msra.mxu0 %v88
    %309 = vmatprep.subr.mxu0 0.0
    %310 = vmatpush1.msra.mxu0 %v89
    %311 = vmatprep.subr.mxu0 0.0
    %312 = vmatpush1.msra.mxu0 %v90
    %313 = vmatprep.subr.mxu0 0.0
    %314 = vmatpush1.msra.mxu0 %v91
    %315 = vmatprep.subr.mxu0 0.0
    %316 = vmatpush1.msra.mxu0 %v92
    %317 = vmatprep.subr.mxu0 0.0
    %318 = vmatpush1.msra.mxu0 %v93
    %319 = vmatprep.subr.mxu0 0.0
    %320 = vmatpush1.msra.mxu0 %v94
    %321 = vmatprep.subr.mxu0 0.0
    %322 = vmatpush1.msra.mxu0 %v95
    %323 = vmatprep.subr.mxu0 0.0
    %324 = vmatpush1.msra.mxu0 %v96
    %325 = vmatprep.subr.mxu0 0.0
    %326 = vmatpush1.msra.mxu0 %v97
    %327 = vmatprep.subr.mxu0 0.0
    %328 = vmatpush1.msra.mxu0 %v98
    %329 = vmatprep.subr.mxu0 0.0
    %330 = vmatpush1.msra.mxu0 %v99
    %331 = vmatprep.subr.mxu0 0.0
    %332 = vmatpush1.msra.mxu0 %v100
    %333 = vmatprep.subr.mxu0 0.0
    %334 = vmatpush1.msra.mxu0 %v101
    %335 = vmatprep.subr.mxu0 0.0
    %336 = vmatpush1.msra.mxu0 %v102
    %337 = vmatprep.subr.mxu0 0.0
    %338 = vmatpush1.msra.mxu0 %v103
    %339 = vmatprep.subr.mxu0 0.0
    %340 = vmatpush1.msra.mxu0 %v104
    %341 = vmatprep.subr.mxu0 0.0
    %342 = vmatpush1.msra.mxu0 %v105
    %343 = vmatprep.subr.mxu0 0.0
    %344 = vmatpush1.msra.mxu0 %v106
    %345 = vmatprep.subr.mxu0 0.0
    %346 = vmatpush1.msra.mxu0 %v107
    %347 = vmatprep.subr.mxu0 0.0
    %348 = vmatpush1.msra.mxu0 %v108
    %349 = vmatprep.subr.mxu0 0.0
    %350 = vmatpush1.msra.mxu0 %v109
    %351 = vmatprep.subr.mxu0 0.0
    %352 = vmatpush1.msra.mxu0 %v110
    %353 = vmatprep.subr.mxu0 0.0
    %354 = vmatpush1.msra.mxu0 %v111
    %355 = vmatprep.subr.mxu0 0.0
    %356 = vmatpush1.msra.mxu0 %v112
    %357 = vmatprep.mubr.f32.mxu0 %v146
    %358 = vmatmul.mubr.f32.gmra.mrb[0].mxu0 %v145
    %v359 = vpop.f32.mrb[0].mxu0
    %v360 = vadd.f32 %v290, %v359
    %v361 = vpop.f32.mrb[0].mxu0
    %362 = vdwg.mxu0
    %vm363 = vcmask 17408
    %364 = vst.msk [vmem:[#allocation2] sm:$0x3] %vm363, %v360
    // Predicated region
    $region14: #{amodel_forward.1} parent=1 // pred_check
      _
    $region15: #{amodel_forward.1} parent=1 // pred_check_branch
      %366 = sbr.rel (0) target = $region17
    $region16: #{amodel_forward.1} parent=1 // pred_region
      %s368 = ssub.s32 32, 32
      %369 = vsyncadd [#allocation3], %s368
      %s371 = sshll.u32 [#allocation2], 4
      %s372 = int_to_ptr.vmem [resolvable:$true] %s371
      %374 = dma.vmem_to_hbm [thread:$0]  %s372, 32, %s3, [#allocation3]
    $region17: #{amodel_forward.1} parent=1 // pred_fallthru
      _
    // Predicated region
    $region18: #{amodel_forward.1} parent=1 // pred_check
      _
    $region19: #{amodel_forward.1} parent=1 // pred_check_branch
      %376 = sbr.rel (0) target = $region21
    $region20: #{amodel_forward.1} parent=1 // pred_region
      %377 = dma.done [#allocation3], 32
    $region21: #{amodel_forward.1} parent=1 // pred_fallthru
      _
    %378 = vsyncpa [#allocation3], 1

</llo_original>
